<compile_context>
chip_gen: v6e
topology: v6e:2x2x1
jax: 0.10.0
libtpu: 0.0.40
codegen_flags: <defaults>
</compile_context>

<pallas_src>
from typing import Callable, Optional

import jax
import jax.numpy as jnp
from jax.experimental import pallas as pl
from jax.experimental.pallas import tpu as pltpu


# ---------------------------------------------------------------------------
# Pallas kernel: depth_connection  (out = branch_out + residuals), cast in-kernel
# ---------------------------------------------------------------------------
def _residual_add_kernel(branch_ref, res_ref, out_ref):
    # Identity residual_transform -> plain elementwise add on the VPU.
    # Casts are free here (VALU slack on a mem-bound kernel).
    out_ref[...] = (
        branch_ref[...].astype(out_ref.dtype) + res_ref[...].astype(out_ref.dtype)
    )


# Lane candidates: scan wide 128-multiples first (longer unmasked vst / fewer,
# longer DMA descriptors), fall back to narrower ones.
_LANE_CANDIDATES = (32768, 16384, 8192, 4096, 2048, 1024, 512, 256, 128)


def _lane_dense_view(n_elems: int, last_dim: int):
    """Pick a (rows, lane) 2-D factorization with a 128-multiple lane axis if possible."""
    for lane in _LANE_CANDIDATES:
        if n_elems % lane == 0:
            return n_elems // lane, lane
    # Fallback: element count has no 128-multiple factor. Keep the original
    # trailing dim (block == full dim satisfies the (8,128) rule). Correct but
    # uses masked vst stores on the lane axis.
    # TODO(synk): split bulk/tail (or fuse into producer) to keep the output
    # lane-dense for 128-indivisible element counts as well.
    return n_elems // last_dim, last_dim


def _vmem_limit_and_budget():
    """Generation-aware scoped-VMEM request and tile budget (bytes)."""
    try:
        cap = int(pltpu.get_tpu_info().vmem_capacity_bytes)
    except Exception:
        cap = 64 * 1024 * 1024  # conservative: v7x per-TensorCore VMEM
    # Leave ~25% of physical VMEM as headroom; never request more than 64 MiB scoped.
    #   v7x  (64 MiB physical)  -> 48 MiB scoped, 36 MiB tile budget (~6 MiB/array tile)
    #   v5e/v6e (128 MiB phys.) -> 64 MiB scoped, 48 MiB tile budget (~8 MiB/array tile)
    vmem_limit = min((cap * 3) // 4, 64 * 1024 * 1024)
    budget = (vmem_limit * 3) // 4
    return vmem_limit, budget


# Keep at least this many grid steps on large arrays so v7x's 2 TensorCores can
# both stream (grid axis is marked "parallel"); harmless on v5e/v6e.
_MIN_GRID_STEPS = 4


def depth_connection(branch_out: jax.Array, residuals: jax.Array) -> jax.Array:
    """branch_out + Identity(residuals), computed in a Pallas TPU kernel."""
    assert branch_out.shape == residuals.shape, (branch_out.shape, residuals.shape)
    orig_shape = branch_out.shape
    out_dtype = jnp.result_type(branch_out.dtype, residuals.dtype)

    if branch_out.ndim == 0 or branch_out.size == 0:
        # Degenerate shapes: nothing to tile.
        return (branch_out.astype(out_dtype) + residuals.astype(out_dtype)).reshape(orig_shape)

    n_elems = branch_out.size
    rows, lane = _lane_dense_view(n_elems, orig_shape[-1])

    # Free reshapes on contiguous HBM arrays; decouples tiling from (B, S, D).
    a2 = branch_out.reshape(rows, lane)
    b2 = residuals.reshape(rows, lane)

    # VMEM footprint per 8-row sublane group = sum of the three tiles' actual
    # itemsizes x 2 pipeline buffers.  Tile as large as the budget allows.
    vmem_limit, budget_bytes = _vmem_limit_and_budget()
    bytes_per_row = lane * (
        jnp.dtype(branch_out.dtype).itemsize
        + jnp.dtype(residuals.dtype).itemsize
        + jnp.dtype(out_dtype).itemsize
    )
    max_tile_rows = max(8, (budget_bytes // (2 * bytes_per_row)) // 8 * 8)

    tile_r = min(rows, max_tile_rows)
    if tile_r < rows:
        # Sublane-aligned block; Pallas masks the partial final block (row axis only).
        tile_r = max(8, (tile_r // 8) * 8)

    # Megacore: when the array is big enough, force >= _MIN_GRID_STEPS steps so
    # both v7x TensorCores get work even if one tile would have fit the budget.
    if rows >= _MIN_GRID_STEPS * 8:
        core_cap = max(8, ((pl.cdiv(rows, _MIN_GRID_STEPS) + 7) // 8) * 8)
        tile_r = min(tile_r, core_cap)

    grid = (pl.cdiv(rows, tile_r),)

    extra_kwargs = {}
    if branch_out.dtype == out_dtype:
        # Donate branch_out's buffer as the output (no hazard: each grid step
        # reads and writes the same block index).
        extra_kwargs["input_output_aliases"] = {0: 0}

    out2 = pl.pallas_call(
        _residual_add_kernel,
        out_shape=jax.ShapeDtypeStruct((rows, lane), out_dtype),
        grid_spec=pltpu.PrefetchScalarGridSpec(
            num_scalar_prefetch=0,
            grid=grid,
            in_specs=[
                pl.BlockSpec((tile_r, lane), lambda i: (i, 0)),
                pl.BlockSpec((tile_r, lane), lambda i: (i, 0)),
            ],
            out_specs=pl.BlockSpec((tile_r, lane), lambda i: (i, 0)),
        ),
        compiler_params=pltpu.CompilerParams(
            dimension_semantics=("parallel",),
            vmem_limit_bytes=vmem_limit,
        ),
        **extra_kwargs,
    )(a2, b2)

    return out2.reshape(orig_shape)


# ---------------------------------------------------------------------------
# Residual module (JAX mirror of the PyTorch Module's forward semantics)
# ---------------------------------------------------------------------------
class Residual:
    def __init__(self, branch: Optional[Callable] = None,
                 residual_transform: Optional[Callable] = None):
        self.branch = branch
        # default residual_transform is Identity; non-identity transforms are
        # applied (in plain JAX) before the fused residual-add kernel.
        self.residual_transform = (
            residual_transform if residual_transform is not None else (lambda x: x)
        )

    def width_connection(self, residuals):
        return residuals, residuals, dict()

    def depth_connection(self, branch_output, residuals):
        residuals = self.residual_transform(residuals)
        return depth_connection(branch_output, residuals)

    def decorate_branch(self, branch: Callable):
        assert self.branch is None, "branch was already wrapped on init"

        def forward_and_add_residual(residual, *args, **kwargs):
            branch_input, add_residual = self.forward(residual)
            branch_output = branch(branch_input, *args, **kwargs)
            return add_residual(branch_output)

        return forward_and_add_residual

    def forward(self, residuals, *branch_args, **branch_kwargs):
        branch_input, residuals, residual_kwargs = self.width_connection(residuals)

        def add_residual_fn(branch_out):
            # torch tree_flatten/unflatten is a pass-through for a plain tensor;
            # we support a single array (the common case).
            return self.depth_connection(branch_out, residuals, **residual_kwargs)

        if self.branch is None:
            return branch_input, add_residual_fn

        branch_output = self.branch(branch_input, *branch_args, **branch_kwargs)
        return add_residual_fn(branch_output)

    __call__ = forward


# ---------------------------------------------------------------------------
# Demo / self-test
# ---------------------------------------------------------------------------
if __name__ == "__main__":
    key = jax.random.PRNGKey(0)
    k_x, k_y = jax.random.split(key)

    B, S, D = 2, 8, 32
    x = jax.random.normal(k_x, (B, S, D), dtype=jnp.float32)

    # A deterministic stand-in "branch" (the Residual module itself has no params).
    def branch_fn(t):
        return jnp.tanh(t) * 0.5

    residual = Residual()  # branch=None, residual_transform=Identity

    # forward with branch=None returns (branch_input, add_residual_fn)
    branch_input, add_residual = residual.forward(x)
    branch_output = branch_fn(branch_input)
    out = jax.block_until_ready(add_residual(branch_output))

    # Also exercise decorate_branch path.
    wrapped = Residual().decorate_branch(branch_fn)
    out2 = jax.block_until_ready(wrapped(x))

    # Reference checks (f32 path).
    ref = branch_fn(x) + x
    assert out.shape == (B, S, D) and out.dtype == jnp.float32
    assert jnp.allclose(out, ref, atol=1e-6), "mismatch vs reference"
    assert jnp.allclose(out2, ref, atol=1e-6), "mismatch vs reference (decorate_branch)"

    # Mixed-dtype path: bf16 branch output + f32 residuals, cast happens in-kernel.
    bo_bf16 = branch_fn(x).astype(jnp.bfloat16)
    out_mixed = jax.block_until_ready(Residual().depth_connection(bo_bf16, x))
    ref_mixed = bo_bf16.astype(jnp.float32) + x
    assert out_mixed.dtype == jnp.float32
    assert jnp.allclose(out_mixed, ref_mixed, atol=1e-2), "mismatch (mixed dtype)"

    # Non-128-divisible element count (fallback path, masked lane stores).
    y = jax.random.normal(k_y, (2, 3, 5), dtype=jnp.float32)
    out_odd = jax.block_until_ready(Residual().depth_connection(branch_fn(y), y))
    assert out_odd.shape == (2, 3, 5)
    assert jnp.allclose(out_odd, branch_fn(y) + y, atol=1e-6), "mismatch (odd shape)"

    print("KERNEL_OK")
</pallas_src>

<mosaic_0001>
module attributes {stable_mosaic.version = 11 : i64} {
  func.func @_residual_add_kernel(%arg0: i32, %arg1: memref<1x512xf32, #tpu.memory_space<vmem>>, %arg2: memref<1x512xf32, #tpu.memory_space<vmem>>, %arg3: memref<1x512xf32, #tpu.memory_space<vmem>>) attributes {dimension_semantics = [#tpu.dimension_semantics<parallel>], iteration_bounds = array<i64: 1>, scalar_prefetch = 0 : i64, scratch_operands = 0 : i64, tpu.core_type = #tpu.core_type<tc>, window_params = [{transform_indices = @transform_0, window_bounds = array<i64: 1, 512>}, {transform_indices = @transform_1, window_bounds = array<i64: 1, 512>}, {transform_indices = @transform_2, window_bounds = array<i64: 1, 512>}]} {
    %c0 = arith.constant 0 : index
    %c0_0 = arith.constant 0 : index
    %0 = vector.load %arg1[%c0, %c0_0] : memref<1x512xf32, #tpu.memory_space<vmem>>, vector<1x512xf32>
    %c0_1 = arith.constant 0 : index
    %c0_2 = arith.constant 0 : index
    %1 = vector.load %arg2[%c0_1, %c0_2] : memref<1x512xf32, #tpu.memory_space<vmem>>, vector<1x512xf32>
    %2 = arith.addf %0, %1 : vector<1x512xf32>
    %c0_3 = arith.constant 0 : index
    %c0_4 = arith.constant 0 : index
    %3 = vector.load %arg3[%c0_3, %c0_4] : memref<1x512xf32, #tpu.memory_space<vmem>>, vector<1x512xf32>
    tpu.vector_store %arg3[%c0_3, %c0_4], %2 {strides = array<i32>} : memref<1x512xf32, #tpu.memory_space<vmem>>, vector<1x512xf32>,
    return
  }
  func.func @transform_0(%arg0: i32) -> (i32, i32) {
    %c0_i32 = arith.constant 0 : i32
    %c0_i32_0 = arith.constant 0 : i32
    return %arg0, %c0_i32 : i32, i32
  }
  func.func @transform_1(%arg0: i32) -> (i32, i32) {
    %c0_i32 = arith.constant 0 : i32
    %c0_i32_0 = arith.constant 0 : i32
    return %arg0, %c0_i32 : i32, i32
  }
  func.func @transform_2(%arg0: i32) -> (i32, i32) {
    %c0_i32 = arith.constant 0 : i32
    %c0_i32_0 = arith.constant 0 : i32
    return %arg0, %c0_i32 : i32, i32
  }
}

</mosaic_0001>

<llo_original>
// kernel: tpu_custom_call.1
$region0: #{tpu_custom_call.1}
  #allocation0 [shape = 'u32[]', space=smem, size = 0x4, offset = 0x4, fixed_abs, tag = 'smem constant byte address 0x4 - core index']
  #allocation1 [shape = 'u32[144,128]{1,0:T(1,128)}', space=vmem, size = 0x12000, scoped, tag = 'internal scratch']
  %s0 = inlined_call_operand.hbm [shape: f32[1,512], index: 0, kind: input, shape index: {}, may-alias: {0,2}]
  %s1 = inlined_call_operand.vmem [shape: f32[1,512], index: 1, kind: input, shape index: {}]
  %s2 = inlined_call_operand.hbm [shape: f32[1,512], index: 2, kind: output, shape index: {}, may-alias: {0,2}]
  %s3 = sld [smem:[#allocation0]]
  $region22: #{tpu_custom_call.1} parent=0
    _
  %s5 = ssub.s32 1, %s3
  %s6 = scalar_select 0, %s5, %s3
  $region1: #{tpu_custom_call.1} parent=0
    #allocation2 [shape = 'u8[2048]{0}', space=vmem, size = 0x800, scoped, tag = 'input window, operand 0, single buffered']
    #allocation3 [shape = 's32[1]{0}', space=sflag, size = 0x4, scoped, tag = 'scoped memory for tpu_custom_call.1']
    #allocation4 [shape = 's32[1]{0}', space=sflag, size = 0x4, scoped, tag = 'scoped memory for tpu_custom_call.1']
    #allocation5 [shape = 'u8[2048]{0}', space=vmem, size = 0x800, scoped, tag = 'output window, operand 0, single buffered']
    %7 = vsyncpa [#allocation3], 0
    %8 = vsyncpa [#allocation4], 0
    // Predicated region
    $region2: #{tpu_custom_call.1} parent=1 // pred_check
      _
    $region3: #{tpu_custom_call.1} parent=1 // pred_check_branch
      %10 = sbr.rel (0) target = $region5
    $region4: #{tpu_custom_call.1} parent=1 // pred_region
      %s12 = ssub.s32 64, 64
      %13 = vsyncadd [#allocation3], %s12
      %s15 = sshll.u32 [#allocation2], 4
      %s16 = int_to_ptr.vmem [resolvable:$true] %s15
      %18 = dma.hbm_to_vmem [thread:$0]  %s0, 64, %s16, [#allocation3]
    $region5: #{tpu_custom_call.1} parent=1 // pred_fallthru
      _
    // Predicated region
    $region6: #{tpu_custom_call.1} parent=1 // pred_check
      _
    $region7: #{tpu_custom_call.1} parent=1 // pred_check_branch
      %20 = sbr.rel (0) target = $region9
    $region8: #{tpu_custom_call.1} parent=1 // pred_region
      _
    $region9: #{tpu_custom_call.1} parent=1 // pred_fallthru
      _
    // Predicated region
    $region10: #{tpu_custom_call.1} parent=1 // pred_check
      _
    $region11: #{tpu_custom_call.1} parent=1 // pred_check_branch
      %22 = sbr.rel (0) target = $region13
    $region12: #{tpu_custom_call.1} parent=1 // pred_region
      %23 = dma.done [#allocation3], 64
    $region13: #{tpu_custom_call.1} parent=1 // pred_fallthru
      _
    %v24 = vld [vmem:[#allocation2] sm:$0xf]
    %v25 = vld [vmem:[%s1] sm:$0xf]
    %v26 = vadd.f32 %v24, %v25
    %v27 = vlaneseq
    %vm28 = vcmp.ge.s32.totalorder %v27, 0
    %vm29 = vcmp.lt.s32.totalorder %v27, 512
    %vm30 = vmand %vm28, %vm29
    %31 = vst.msk [vmem:[#allocation5] sm:$0xf] %vm30, %v26
    // Predicated region
    $region14: #{tpu_custom_call.1} parent=1 // pred_check
      _
    $region15: #{tpu_custom_call.1} parent=1 // pred_check_branch
      %33 = sbr.rel (0) target = $region17
    $region16: #{tpu_custom_call.1} parent=1 // pred_region
      %s35 = ssub.s32 64, 64
      %36 = vsyncadd [#allocation4], %s35
      %s38 = sshll.u32 [#allocation5], 4
      %s39 = int_to_ptr.vmem [resolvable:$true] %s38
      %41 = dma.vmem_to_hbm [thread:$0]  %s39, 64, %s2, [#allocation4]
    $region17: #{tpu_custom_call.1} parent=1 // pred_fallthru
      _
    // Predicated region
    $region18: #{tpu_custom_call.1} parent=1 // pred_check
      _
    $region19: #{tpu_custom_call.1} parent=1 // pred_check_branch
      %43 = sbr.rel (0) target = $region21
    $region20: #{tpu_custom_call.1} parent=1 // pred_region
      %44 = dma.done [#allocation4], 64
    $region21: #{tpu_custom_call.1} parent=1 // pred_fallthru
      _
    %45 = vsyncpa [#allocation3], 1
    %46 = vsyncpa [#allocation4], 1

</llo_original>
